<compile_context>
chip_gen: v7x
topology: tpu7x:2x2x1
jax: 0.10.0
libtpu: 0.0.40
codegen_flags: <defaults>
</compile_context>

<pallas_src>
import functools
import math

import jax
import jax.numpy as jnp
from jax.experimental import pallas as pl
from jax.experimental.pallas import tpu as pltpu

_LANES = 128
_F32_SUBLANES = 8
_MAX_BLOCK_BYTES = 4 * 1024 * 1024      # 4 MiB per input block
_VMEM_LIMIT_BYTES = 32 * 1024 * 1024    # 2 inputs x 2 buffers x 4 MiB + slack


def _round_up(x, m):
    return ((x + m - 1) // m) * m


def _clamped_softplus(d, neg_log_gamma):
    # -log(gamma + sigmoid(d)) ~= min(softplus(-d), -log(gamma)); 2 EUP ops.
    return jnp.minimum(jnp.log(1.0 + jnp.exp(-d)), neg_log_gamma)


def _bpr_kernel(pos_ref, neg_ref, out_ref, *, neg_log_gamma, block_rows,
                valid_rows_last, grid_len):
    i = pl.program_id(0)

    @pl.when(i == 0)
    def _():
        out_ref[...] = jnp.zeros_like(out_ref)

    d = pos_ref[...].astype(jnp.float32) - neg_ref[...].astype(jnp.float32)
    val = _clamped_softplus(d, neg_log_gamma)

    def _accumulate(v):
        # VPU-only partial reduce: fold the block onto one (8,128) vreg.
        part = v.reshape(block_rows // _F32_SUBLANES, _F32_SUBLANES, _LANES)
        out_ref[...] += part.sum(axis=0)

    if valid_rows_last == block_rows:
        # Every grid block is full: unmasked fast path everywhere.
        _accumulate(val)
    else:
        # Only the final block is partial; mask it there and nowhere else.
        @pl.when(i < grid_len - 1)
        def _():
            _accumulate(val)

        @pl.when(i == grid_len - 1)
        def _():
            row = jax.lax.broadcasted_iota(jnp.int32, (block_rows, _LANES), 0)
            _accumulate(jnp.where(row < valid_rows_last, val, 0.0))


def bpr_loss(pos_score, neg_score, gamma=1e-10, *, max_block_rows=None):
    """Pallas TPU implementation of BPRLoss.forward. Returns a scalar f32."""
    assert pos_score.shape == neg_score.shape
    pos = jnp.ravel(pos_score)
    neg = jnp.ravel(neg_score)

    dtype = jnp.promote_types(pos.dtype, neg.dtype)
    if not jnp.issubdtype(dtype, jnp.floating):
        dtype = jnp.float32
    if pos.dtype != dtype:
        pos = pos.astype(dtype)
    if neg.dtype != dtype:
        neg = neg.astype(dtype)

    n = pos.shape[0]
    neg_log_gamma = -math.log(float(gamma))

    itemsize = jnp.dtype(dtype).itemsize
    sub = _F32_SUBLANES * max(1, 4 // itemsize)   # 8 for f32, 16 for bf16
    granule = sub * _LANES                        # whole native tiles only
    n_bulk = (n // granule) * granule
    n_tail = n - n_bulk

    total = jnp.float32(0.0)

    if n_bulk > 0:
        rows_total = n_bulk // _LANES             # multiple of `sub`
        if max_block_rows is None:
            max_block_rows = max(sub, _MAX_BLOCK_BYTES // (_LANES * itemsize))
        max_block_rows = _round_up(int(max_block_rows), sub)
        block_rows = min(max_block_rows, rows_total)
        grid_len = pl.cdiv(rows_total, block_rows)
        valid_rows_last = rows_total - (grid_len - 1) * block_rows

        # Free reshape when n is tile-aligned; only a ragged n pays a slice.
        pos_b = (pos if n_tail == 0 else pos[:n_bulk]).reshape(rows_total, _LANES)
        neg_b = (neg if n_tail == 0 else neg[:n_bulk]).reshape(rows_total, _LANES)

        kernel = functools.partial(
            _bpr_kernel,
            neg_log_gamma=neg_log_gamma,
            block_rows=block_rows,
            valid_rows_last=valid_rows_last,
            grid_len=grid_len)

        in_spec = pl.BlockSpec((block_rows, _LANES), lambda i: (i, 0))
        out_spec = pl.BlockSpec((_F32_SUBLANES, _LANES), lambda i: (0, 0))

        partial_sums = pl.pallas_call(
            kernel,
            out_shape=jax.ShapeDtypeStruct((_F32_SUBLANES, _LANES), jnp.float32),
            grid=(grid_len,),
            in_specs=[in_spec, in_spec],
            out_specs=out_spec,
            compiler_params=pltpu.CompilerParams(
                dimension_semantics=("arbitrary",),
                vmem_limit_bytes=_VMEM_LIMIT_BYTES),
        )(pos_b, neg_b)

        total = total + jnp.sum(partial_sums)

    if n_tail > 0:
        # <1-tile ragged tail: trivial jnp epilogue (same math as the kernel).
        d = pos[n_bulk:].astype(jnp.float32) - neg[n_bulk:].astype(jnp.float32)
        total = total + jnp.sum(_clamped_softplus(d, neg_log_gamma))

    return total / n


if __name__ == "__main__":
    key = jax.random.PRNGKey(0)
    gamma = 1e-10

    def reference(p, q):
        p32 = p.astype(jnp.float32)
        q32 = q.astype(jnp.float32)
        return -jnp.mean(jnp.log(gamma + jax.nn.sigmoid(p32 - q32)))

    cases = [
        dict(n=4096, dtype=jnp.float32, max_block_rows=None),   # aligned, 1 block
        dict(n=5000, dtype=jnp.float32, max_block_rows=None),   # ragged tail epilogue
        dict(n=4096, dtype=jnp.float32, max_block_rows=8),      # multi-block accumulation
        dict(n=5120, dtype=jnp.float32, max_block_rows=16),     # masked partial last block
        dict(n=2148, dtype=jnp.bfloat16, max_block_rows=None),  # bf16 granule + tail
        dict(n=8,    dtype=jnp.float32, max_block_rows=None),   # tiny: pure-jnp fallback
    ]

    for idx, c in enumerate(cases):
        kp, kn = jax.random.split(jax.random.fold_in(key, idx))
        pos_score = jax.random.normal(kp, (c["n"],), dtype=jnp.float32).astype(c["dtype"])
        neg_score = jax.random.normal(kn, (c["n"],), dtype=jnp.float32).astype(c["dtype"])

        loss = bpr_loss(pos_score, neg_score, gamma,
                        max_block_rows=c["max_block_rows"])
        jax.block_until_ready(loss)

        ref = reference(pos_score, neg_score)
        assert jnp.allclose(loss, ref, atol=1e-5, rtol=1e-5), (c, loss, ref)

    print("KERNEL_OK")
</pallas_src>

<mosaic_0001>
module attributes {stable_mosaic.version = 11 : i64} {
  func.func @_bpr_kernel(%arg0: i32, %arg1: memref<32x128xf32, #tpu.memory_space<vmem>>, %arg2: memref<32x128xf32, #tpu.memory_space<vmem>>, %arg3: memref<8x128xf32, #tpu.memory_space<vmem>>) attributes {dimension_semantics = [#tpu.dimension_semantics<arbitrary>], iteration_bounds = array<i64: 1>, scalar_prefetch = 0 : i64, scratch_operands = 0 : i64, tpu.core_type = #tpu.core_type<tc>, window_params = [{transform_indices = @transform_0, window_bounds = array<i64: 32, 128>}, {transform_indices = @transform_1, window_bounds = array<i64: 32, 128>}, {pipeline_mode = #tpu.pipeline_mode<synchronous>, transform_indices = @transform_2, window_bounds = array<i64: 8, 128>}]} {
    %c0_i32 = arith.constant 0 : i32
    %0 = arith.cmpi eq, %arg0, %c0_i32 : i32
    %1 = arith.extui %0 : i1 to i32
    %c0_i32_0 = arith.constant 0 : i32
    %2 = arith.cmpi ne, %1, %c0_i32_0 : i32
    scf.if %2 {
      %cst_11 = arith.constant 0.000000e+00 : f32
      %19 = vector.broadcast %cst_11 : f32 to vector<8x128xf32>
      %c0_12 = arith.constant 0 : index
      %c0_13 = arith.constant 0 : index
      %20 = vector.load %arg3[%c0_12, %c0_13] : memref<8x128xf32, #tpu.memory_space<vmem>>, vector<8x128xf32>
      tpu.vector_store %arg3[%c0_12, %c0_13], %19 {strides = array<i32>} : memref<8x128xf32, #tpu.memory_space<vmem>>, vector<8x128xf32>,
    } else {
    }
    %c0 = arith.constant 0 : index
    %c0_1 = arith.constant 0 : index
    %3 = vector.load %arg1[%c0, %c0_1] : memref<32x128xf32, #tpu.memory_space<vmem>>, vector<32x128xf32>
    %c0_2 = arith.constant 0 : index
    %c0_3 = arith.constant 0 : index
    %4 = vector.load %arg2[%c0_2, %c0_3] : memref<32x128xf32, #tpu.memory_space<vmem>>, vector<32x128xf32>
    %5 = arith.subf %3, %4 : vector<32x128xf32>
    %cst = arith.constant 0.000000e+00 : f32
    %6 = vector.broadcast %cst : f32 to vector<32x128xf32>
    %7 = arith.subf %6, %5 : vector<32x128xf32>
    %8 = math.exp %7 : vector<32x128xf32>
    %cst_4 = arith.constant 1.000000e+00 : f32
    %9 = vector.broadcast %cst_4 : f32 to vector<32x128xf32>
    %10 = arith.addf %9, %8 : vector<32x128xf32>
    %11 = math.log %10 : vector<32x128xf32>
    %cst_5 = arith.constant 23.0258503 : f32
    %12 = vector.broadcast %cst_5 : f32 to vector<32x128xf32>
    %13 = arith.minimumf %11, %12 : vector<32x128xf32>
    %14 = vector.shape_cast %13 : vector<32x128xf32> to vector<4x8x128xf32>
    %c0_6 = arith.constant 0 : index
    %c0_7 = arith.constant 0 : index
    %15 = vector.load %arg3[%c0_6, %c0_7] : memref<8x128xf32, #tpu.memory_space<vmem>>, vector<8x128xf32>
    %cst_8 = arith.constant dense<0.000000e+00> : vector<8x128xf32>
    %16 = vector.multi_reduction <add>, %14, %cst_8 [0] : vector<4x8x128xf32> to vector<8x128xf32>
    %17 = arith.addf %15, %16 : vector<8x128xf32>
    %c0_9 = arith.constant 0 : index
    %c0_10 = arith.constant 0 : index
    %18 = vector.load %arg3[%c0_9, %c0_10] : memref<8x128xf32, #tpu.memory_space<vmem>>, vector<8x128xf32>
    tpu.vector_store %arg3[%c0_9, %c0_10], %17 {strides = array<i32>} : memref<8x128xf32, #tpu.memory_space<vmem>>, vector<8x128xf32>,
    return
  }
  func.func @transform_0(%arg0: i32) -> (i32, i32) {
    %c0_i32 = arith.constant 0 : i32
    %c0_i32_0 = arith.constant 0 : i32
    return %arg0, %c0_i32 : i32, i32
  }
  func.func @transform_1(%arg0: i32) -> (i32, i32) {
    %c0_i32 = arith.constant 0 : i32
    %c0_i32_0 = arith.constant 0 : i32
    return %arg0, %c0_i32 : i32, i32
  }
  func.func @transform_2(%arg0: i32) -> (i32, i32) {
    %c0_i32 = arith.constant 0 : i32
    %c0_i32_0 = arith.constant 0 : i32
    %c0_i32_1 = arith.constant 0 : i32
    return %c0_i32, %c0_i32_0 : i32, i32
  }
}

</mosaic_0001>

<llo_original>
// kernel: tpu_custom_call.1
$region0: #{tpu_custom_call.1}
  #allocation0 [shape = 'u32[]', space=smem, size = 0x4, offset = 0x4, fixed_abs, tag = 'smem constant byte address 0x4 - core index']
  #allocation1 [shape = 'u32[144,128]{1,0:T(1,128)}', space=vmem, size = 0x12000, scoped, tag = 'internal scratch']
  %s0 = inlined_call_operand.hbm [shape: f32[32,128], index: 0, kind: input, shape index: {}]
  %s1 = inlined_call_operand.hbm [shape: f32[32,128], index: 1, kind: input, shape index: {}]
  %s2 = inlined_call_operand.hbm [shape: f32[8,128], index: 2, kind: output, shape index: {}]
  %s3 = sld [smem:[#allocation0]]
  $region30: #{tpu_custom_call.1} parent=0
    _
  %s5 = ssub.s32 1, %s3
  %s6 = scalar_select 0, %s5, %s3
  $region1: #{tpu_custom_call.1} parent=0
    #allocation2 [shape = 'u8[16384]{0}', space=vmem, size = 0x4000, scoped, tag = 'input window, operand 0, single buffered']
    #allocation3 [shape = 's32[1]{0}', space=sflag, size = 0x4, scoped, tag = 'scoped memory for tpu_custom_call.1']
    #allocation4 [shape = 's32[1]{0}', space=sflag, size = 0x4, scoped, tag = 'scoped memory for tpu_custom_call.1']
    #allocation5 [shape = 'u8[16384]{0}', space=vmem, size = 0x4000, scoped, tag = 'input window, operand 1, single buffered']
    #allocation6 [shape = 's32[1]{0}', space=sflag, size = 0x4, scoped, tag = 'scoped memory for tpu_custom_call.1']
    #allocation7 [shape = 'u8[4096]{0}', space=vmem, size = 0x1000, scoped, tag = 'output window, operand 0, single buffered']
    %7 = vsyncpa [#allocation3], 0
    %8 = vsyncpa [#allocation6], 0
    %9 = vsyncpa [#allocation4], 0
    // Predicated region
    $region2: #{tpu_custom_call.1} parent=1 // pred_check
      _
    $region3: #{tpu_custom_call.1} parent=1 // pred_check_branch
      %11 = sbr.rel (0) target = $region5
    $region4: #{tpu_custom_call.1} parent=1 // pred_region
      %s13 = ssub.s32 512, 512
      %14 = vsyncadd [#allocation3], %s13
      %s15 = sshll.u32 [#allocation2], 4
      %s16 = int_to_ptr.vmem [resolvable:$true] %s15
      %21 = dma.hbm_to_vmem [thread:$0]  %s0, 512, %s16, [#allocation3], 128, 128, 8
    $region5: #{tpu_custom_call.1} parent=1 // pred_fallthru
      _
    // Predicated region
    $region6: #{tpu_custom_call.1} parent=1 // pred_check
      _
    $region7: #{tpu_custom_call.1} parent=1 // pred_check_branch
      %23 = sbr.rel (0) target = $region9
    $region8: #{tpu_custom_call.1} parent=1 // pred_region
      %s25 = ssub.s32 512, 512
      %26 = vsyncadd [#allocation6], %s25
      %s27 = sshll.u32 [#allocation5], 4
      %s28 = int_to_ptr.vmem [resolvable:$true] %s27
      %33 = dma.hbm_to_vmem [thread:$0]  %s1, 512, %s28, [#allocation6], 128, 128, 8
    $region9: #{tpu_custom_call.1} parent=1 // pred_fallthru
      _
    // Predicated region
    $region10: #{tpu_custom_call.1} parent=1 // pred_check
      _
    $region11: #{tpu_custom_call.1} parent=1 // pred_check_branch
      %35 = sbr.rel (0) target = $region13
    $region12: #{tpu_custom_call.1} parent=1 // pred_region
      %36 = dma.done [#allocation3], 512
    $region13: #{tpu_custom_call.1} parent=1 // pred_fallthru
      _
    // Predicated region
    $region14: #{tpu_custom_call.1} parent=1 // pred_check
      _
    $region15: #{tpu_custom_call.1} parent=1 // pred_check_branch
      %38 = sbr.rel (0) target = $region17
    $region16: #{tpu_custom_call.1} parent=1 // pred_region
      %39 = dma.done [#allocation6], 512
    $region17: #{tpu_custom_call.1} parent=1 // pred_fallthru
      _
    %p40 = scmp.eq.s32.totalorder 0, 0
    // Predicated region
    $region18: #{tpu_custom_call.1} parent=1 // pred_check
      %p41 = pneg %p40
    $region19: #{tpu_custom_call.1} parent=1 // pred_check_branch
      %43 = sbr.rel (%p41) target = $region21
    $region20: #{tpu_custom_call.1} parent=1 // pred_region
      %44 = vst [vmem:[#allocation7] sm:$0xff] 0.0
    $region21: #{tpu_custom_call.1} parent=1 // pred_fallthru
      _
    %v45 = vld [vmem:[#allocation2] sm:$0xff]
    %v46 = vld [vmem:[#allocation2 + $0x8] sm:$0xff]
    %v47 = vld [vmem:[#allocation2 + $0x10] sm:$0xff]
    %v48 = vld [vmem:[#allocation2 + $0x18] sm:$0xff]
    %v49 = vld [vmem:[#allocation5] sm:$0xff]
    %v50 = vld [vmem:[#allocation5 + $0x8] sm:$0xff]
    %v51 = vld [vmem:[#allocation5 + $0x10] sm:$0xff]
    %v52 = vld [vmem:[#allocation5 + $0x18] sm:$0xff]
    %v53 = vsub.f32 %v45, %v49
    %v54 = vsub.f32 %v46, %v50
    %v55 = vsub.f32 %v47, %v51
    %v56 = vsub.f32 %v48, %v52
    %v57 = vsub.f32 0.0, %v53
    %v58 = vsub.f32 0.0, %v54
    %v59 = vsub.f32 0.0, %v55
    %v60 = vsub.f32 0.0, %v56
    %v61 = vmul.f32 %v57, 1.442695
    %v62 = vpow.pop %v61
    %v63 = vmul.f32 %v58, 1.442695
    %v64 = vpow.pop %v63
    %v65 = vmul.f32 %v59, 1.442695
    %v66 = vpow.pop %v65
    %v67 = vmul.f32 %v60, 1.442695
    %v68 = vpow.pop %v67
    %v69 = vadd.f32 %v62, 1.0
    %v70 = vadd.f32 %v64, 1.0
    %v71 = vadd.f32 %v66, 1.0
    %v72 = vadd.f32 %v68, 1.0
    %v73 = vlog2.pop %v69
    %v74 = vmul.f32 %v73, 0.6931472
    %v75 = vlog2.pop %v70
    %v76 = vmul.f32 %v75, 0.6931472
    %v77 = vlog2.pop %v71
    %v78 = vmul.f32 %v77, 0.6931472
    %v79 = vlog2.pop %v72
    %v80 = vmul.f32 %v79, 0.6931472
    %v81 = vmin.f32 %v74, 23.02585
    %v82 = vmin.f32 %v76, 23.02585
    %v83 = vmin.f32 %v78, 23.02585
    %v84 = vmin.f32 %v80, 23.02585
    %v85 = vld [vmem:[#allocation7] sm:$0xff]
    %v86 = vadd.f32 %v81, %v82
    %v87 = vadd.f32 %v86, %v83
    %v88 = vadd.f32 %v87, %v84
    %v89 = vadd.f32 %v85, %v88
    %90 = vst [vmem:[#allocation7] sm:$0xff] %v89
    // Predicated region
    $region22: #{tpu_custom_call.1} parent=1 // pred_check
      _
    $region23: #{tpu_custom_call.1} parent=1 // pred_check_branch
      %92 = sbr.rel (0) target = $region25
    $region24: #{tpu_custom_call.1} parent=1 // pred_region
      %s94 = ssub.s32 128, 128
      %95 = vsyncadd [#allocation4], %s94
      %s97 = sshll.u32 [#allocation7], 4
      %s98 = int_to_ptr.vmem [resolvable:$true] %s97
      %100 = dma.vmem_to_hbm [thread:$0]  %s98, 128, %s2, [#allocation4]
    $region25: #{tpu_custom_call.1} parent=1 // pred_fallthru
      _
    // Predicated region
    $region26: #{tpu_custom_call.1} parent=1 // pred_check
      _
    $region27: #{tpu_custom_call.1} parent=1 // pred_check_branch
      %102 = sbr.rel (0) target = $region29
    $region28: #{tpu_custom_call.1} parent=1 // pred_region
      %103 = dma.done [#allocation4], 128
    $region29: #{tpu_custom_call.1} parent=1 // pred_fallthru
      _
    %104 = vsyncpa [#allocation3], 1
    %105 = vsyncpa [#allocation6], 1
    %106 = vsyncpa [#allocation4], 1

</llo_original>
